<compile_context>
chip_gen: v5e
topology: v5e:2x2
jax: 0.10.0
libtpu: 0.0.40
codegen_flags: <defaults>
</compile_context>

<pallas_src>
import functools
import math

import jax
import jax.numpy as jnp
from jax.experimental import pallas as pl
from jax.experimental.pallas import tpu as pltpu


_LANE = 128      # lane width (last dim)
_SUBLANE = 8     # f32 sublane tile (second-to-last dim)


def _drop_path_kernel(s_ref, x_ref, o_ref):
    # s_ref: (TB, 1)  f32 per-sample scale (0.0 or 1/keep_prob)
    # x_ref / o_ref: (TB, TN) tile of the flattened activation
    o_ref[...] = (x_ref[...].astype(jnp.float32) * s_ref[...]).astype(o_ref.dtype)


def _choose_tiles(B, N, itemsize, target_block_bytes=2 * 1024 * 1024):
    """Pick (TB, TN): sublane-dense, lane-dense, ~<= target_block_bytes."""
    # Sublane tile: multiple of 8 (capped) or the full batch when B < 8.
    if B >= _SUBLANE:
        tb = min((B // _SUBLANE) * _SUBLANE, 64)
    else:
        tb = B
    # Lane tile: large multiple of 128 (full extent when N < 128), sized so
    # one block stays around target_block_bytes.
    if N < _LANE:
        tn = N
    else:
        budget_tn = max(_LANE, (target_block_bytes // (tb * itemsize)) // _LANE * _LANE)
        tn = min(budget_tn, (N // _LANE) * _LANE)
    return tb, tn


def drop_path(x, drop_prob: float = 0.0, training: bool = False, *,
              key=None, donate: bool = False,
              block_b: int = None, block_n: int = None):
    """Pallas DropPath.  x: (B, ...) array (any trailing shape, e.g. NCHW)."""
    if drop_prob == 0.0 or not training:
        return x
    assert key is not None, "need a PRNG key when training with drop_prob > 0"
    keep_prob = 1.0 - float(drop_prob)

    B = x.shape[0]
    N = math.prod(x.shape[1:])
    x2 = x.reshape(B, N)

    # Per-sample scale, fully precomputed in f32 in plain JAX (B scalars):
    #   scale_b = floor(keep_prob + U_b) / keep_prob  ->  0 or 1/keep_prob
    rand = jax.random.uniform(key, (B,), dtype=jnp.float32)
    scale = (jnp.floor(keep_prob + rand) * (1.0 / keep_prob)).astype(jnp.float32)
    scale2 = scale.reshape(B, 1)

    tb, tn = _choose_tiles(B, N, jnp.dtype(x.dtype).itemsize)
    if block_b is not None:
        tb = block_b
    if block_n is not None:
        tn = block_n

    grid = (pl.cdiv(B, tb), pl.cdiv(N, tn))

    out2 = pl.pallas_call(
        _drop_path_kernel,
        out_shape=jax.ShapeDtypeStruct((B, N), x.dtype),
        grid=grid,
        in_specs=[
            pl.BlockSpec((tb, 1), lambda i, j: (i, 0)),   # per-sample scale
            pl.BlockSpec((tb, tn), lambda i, j: (i, j)),  # activation tile
        ],
        out_specs=pl.BlockSpec((tb, tn), lambda i, j: (i, j)),
        compiler_params=pltpu.CompilerParams(
            dimension_semantics=("parallel", "parallel"),
        ),
        # In-place when the caller knows x is dead after this op.
        input_output_aliases=({1: 0} if donate else {}),
    )(scale2, x2)

    return out2.reshape(x.shape)


class DropPath:
    """Minimal JAX counterpart of the torch module (no parameters)."""

    def __init__(self, drop_prob=None):
        self.drop_prob = 0.0 if drop_prob is None else float(drop_prob)

    def __call__(self, x, *, training: bool = False, key=None, **kw):
        return drop_path(x, self.drop_prob, training, key=key, **kw)


def _reference(x, drop_prob, key):
    """Plain-JAX reference using the same randoms/arithmetic as the kernel."""
    keep_prob = 1.0 - drop_prob
    B = x.shape[0]
    rand = jax.random.uniform(key, (B,), dtype=jnp.float32)
    scale = jnp.floor(keep_prob + rand) * (1.0 / keep_prob)
    scale = scale.reshape((B,) + (1,) * (x.ndim - 1))
    return (x.astype(jnp.float32) * scale).astype(x.dtype)


if __name__ == "__main__":
    root = jax.random.PRNGKey(0)
    kx, kd = jax.random.split(root)

    B, C, H, W = 2, 4, 16, 16
    x = jax.random.normal(kx, (B, C, H, W), dtype=jnp.float32)

    module = DropPath(drop_prob=0.3)

    # 1) Eval mode: identity.
    y_eval = module(x, training=False)
    jax.block_until_ready(y_eval)
    assert jnp.allclose(y_eval, x)

    # 2) Train mode, default (single large lane-dense tile).
    y_train = module(x, training=True, key=kd)
    jax.block_until_ready(y_train)
    y_ref = _reference(x, module.drop_prob, kd)
    assert jnp.allclose(y_train, y_ref, rtol=1e-6, atol=1e-6)

    # 3) Train mode, forced smaller lane tile -> multi-step grid path.
    y_tiled = module(x, training=True, key=kd, block_n=256)
    jax.block_until_ready(y_tiled)
    assert jnp.allclose(y_tiled, y_ref, rtol=1e-6, atol=1e-6)

    # 4) bf16 activations: scale math stays in f32, product cast back to bf16.
    x_bf16 = x.astype(jnp.bfloat16)
    y_bf16 = module(x_bf16, training=True, key=kd)
    jax.block_until_ready(y_bf16)
    y_bf16_ref = _reference(x_bf16, module.drop_prob, kd)
    assert jnp.allclose(y_bf16.astype(jnp.float32),
                        y_bf16_ref.astype(jnp.float32), rtol=1e-2, atol=1e-2)

    print("KERNEL_OK")
</pallas_src>

<mosaic_0001>
module attributes {stable_mosaic.version = 11 : i64} {
  func.func @_drop_path_kernel(%arg0: i32, %arg1: i32, %arg2: memref<2x1xf32, #tpu.memory_space<vmem>>, %arg3: memref<2x1024xf32, #tpu.memory_space<vmem>>, %arg4: memref<2x1024xf32, #tpu.memory_space<vmem>>) attributes {dimension_semantics = [#tpu.dimension_semantics<parallel>, #tpu.dimension_semantics<parallel>], iteration_bounds = array<i64: 1, 1>, scalar_prefetch = 0 : i64, scratch_operands = 0 : i64, tpu.core_type = #tpu.core_type<tc>, window_params = [{transform_indices = @transform_0, window_bounds = array<i64: 2, 1>}, {transform_indices = @transform_1, window_bounds = array<i64: 2, 1024>}, {transform_indices = @transform_2, window_bounds = array<i64: 2, 1024>}]} {
    %c0 = arith.constant 0 : index
    %c0_0 = arith.constant 0 : index
    %0 = vector.load %arg3[%c0, %c0_0] : memref<2x1024xf32, #tpu.memory_space<vmem>>, vector<2x1024xf32>
    %c0_1 = arith.constant 0 : index
    %c0_2 = arith.constant 0 : index
    %1 = vector.load %arg2[%c0_1, %c0_2] : memref<2x1xf32, #tpu.memory_space<vmem>>, vector<2x1xf32>
    %2 = vector.broadcast %1 : vector<2x1xf32> to vector<2x1024xf32>
    %3 = arith.mulf %0, %2 : vector<2x1024xf32>
    %c0_3 = arith.constant 0 : index
    %c0_4 = arith.constant 0 : index
    %4 = vector.load %arg4[%c0_3, %c0_4] : memref<2x1024xf32, #tpu.memory_space<vmem>>, vector<2x1024xf32>
    tpu.vector_store %arg4[%c0_3, %c0_4], %3 {strides = array<i32>} : memref<2x1024xf32, #tpu.memory_space<vmem>>, vector<2x1024xf32>,
    return
  }
  func.func @transform_0(%arg0: i32, %arg1: i32) -> (i32, i32) {
    %c0_i32 = arith.constant 0 : i32
    %c0_i32_0 = arith.constant 0 : i32
    return %arg0, %c0_i32 : i32, i32
  }
  func.func @transform_1(%arg0: i32, %arg1: i32) -> (i32, i32) {
    %c0_i32 = arith.constant 0 : i32
    return %arg0, %arg1 : i32, i32
  }
  func.func @transform_2(%arg0: i32, %arg1: i32) -> (i32, i32) {
    %c0_i32 = arith.constant 0 : i32
    return %arg0, %arg1 : i32, i32
  }
}

</mosaic_0001>

<llo_original>
// kernel: tpu_custom_call.1
$region0: #{tpu_custom_call.1}
  #allocation0 [shape = 'u32[]', space=smem, size = 0x4, offset = 0x4, fixed_abs, tag = 'smem constant byte address 0x4 - core index']
  #allocation1 [shape = 'u32[72,128]{1,0:T(1,128)}', space=vmem, size = 0x9000, scoped, tag = 'internal scratch']
  %s0 = inlined_call_operand.vmem [shape: f32[2,1], index: 0, kind: input, shape index: {}]
  %s1 = inlined_call_operand.hbm [shape: f32[2,1024], index: 1, kind: input, shape index: {}]
  %s2 = inlined_call_operand.hbm [shape: f32[2,1024], index: 2, kind: output, shape index: {}]
  %s3 = sld [smem:[#allocation0]]
  $region22: #{tpu_custom_call.1} parent=0
    _
  %s5 = ssub.s32 1, %s3
  %s6 = scalar_select 0, %s5, %s3
  $region1: #{tpu_custom_call.1} parent=0
    #allocation2 [shape = 'u8[8192]{0}', space=vmem, size = 0x2000, scoped, tag = 'input window, operand 1, single buffered']
    #allocation3 [shape = 's32[1]{0}', space=sflag, size = 0x4, scoped, tag = 'scoped memory for tpu_custom_call.1']
    #allocation4 [shape = 's32[1]{0}', space=sflag, size = 0x4, scoped, tag = 'scoped memory for tpu_custom_call.1']
    #allocation5 [shape = 'u8[8192]{0}', space=vmem, size = 0x2000, scoped, tag = 'output window, operand 0, single buffered']
    %7 = vsyncpa [#allocation3], 0
    %8 = vsyncpa [#allocation4], 0
    // Predicated region
    $region2: #{tpu_custom_call.1} parent=1 // pred_check
      _
    $region3: #{tpu_custom_call.1} parent=1 // pred_check_branch
      %10 = sbr.rel (0) target = $region5
    $region4: #{tpu_custom_call.1} parent=1 // pred_region
      _
    $region5: #{tpu_custom_call.1} parent=1 // pred_fallthru
      _
    // Predicated region
    $region6: #{tpu_custom_call.1} parent=1 // pred_check
      _
    $region7: #{tpu_custom_call.1} parent=1 // pred_check_branch
      %12 = sbr.rel (0) target = $region9
    $region8: #{tpu_custom_call.1} parent=1 // pred_region
      %14 = vsyncadd [#allocation3], 0
      %s16 = sshll.u32 %s1, 4
      %s17 = int_to_ptr.hbm [resolvable:$true] %s16
      %s18 = sshll.u32 [#allocation2], 4
      %s19 = int_to_ptr.vmem [resolvable:$true] %s18
      %21 = dma.hbm_to_vmem [thread:$0]  %s17, 256, %s19, [#allocation3]
    $region9: #{tpu_custom_call.1} parent=1 // pred_fallthru
      _
    // Predicated region
    $region10: #{tpu_custom_call.1} parent=1 // pred_check
      _
    $region11: #{tpu_custom_call.1} parent=1 // pred_check_branch
      %23 = sbr.rel (0) target = $region13
    $region12: #{tpu_custom_call.1} parent=1 // pred_region
      %25 = dma.done [#allocation3], 256
    $region13: #{tpu_custom_call.1} parent=1 // pred_fallthru
      _
    %v26 = vld [vmem:[#allocation2] sm:$0xff]
    %v27 = vld [vmem:[#allocation2 + $0x8] sm:$0xff]
    %v28 = vld [vmem:[%s0] sm:$0x3]
    %30 = vset.pattern.permute.xlu0 0
    %31 = vperm.xlu0 %30, %v28
    %v32 = vpop.permute.xlu0 %31
    %v34 = vunpack.c.l.s4 269488144
    %v35 = vunpack.c.0.s8 %v34
    %v36 = vperm.slane %v32, %v35
    %v38 = vmul.f32 %v26, %v36
    %v39 = vmul.f32 %v27, %v36
    %40 = vst [vmem:[#allocation5] sm:$0xff] %v38
    %41 = vst [vmem:[#allocation5 + $0x8] sm:$0xff] %v39
    // Predicated region
    $region14: #{tpu_custom_call.1} parent=1 // pred_check
      _
    $region15: #{tpu_custom_call.1} parent=1 // pred_check_branch
      %43 = sbr.rel (0) target = $region17
    $region16: #{tpu_custom_call.1} parent=1 // pred_region
      %45 = vsyncadd [#allocation4], 0
      %s47 = sshll.u32 [#allocation5], 4
      %s48 = int_to_ptr.vmem [resolvable:$true] %s47
      %s49 = sshll.u32 %s2, 4
      %s50 = int_to_ptr.hbm [resolvable:$true] %s49
      %52 = dma.vmem_to_hbm [thread:$0]  %s48, 256, %s50, [#allocation4]
    $region17: #{tpu_custom_call.1} parent=1 // pred_fallthru
      _
    // Predicated region
    $region18: #{tpu_custom_call.1} parent=1 // pred_check
      _
    $region19: #{tpu_custom_call.1} parent=1 // pred_check_branch
      %54 = sbr.rel (0) target = $region21
    $region20: #{tpu_custom_call.1} parent=1 // pred_region
      %56 = dma.done [#allocation4], 256
    $region21: #{tpu_custom_call.1} parent=1 // pred_fallthru
      _
    %57 = vsyncpa [#allocation3], 1
    %58 = vsyncpa [#allocation4], 1

</llo_original>
